<compile_context>
chip_gen: v6e
topology: v6e:2x2x1
jax: 0.10.0
libtpu: 0.0.40
codegen_flags: <defaults>
</compile_context>

<pallas_src>
import functools

import jax
import jax.numpy as jnp
from jax.experimental import pallas as pl
from jax.experimental.pallas import tpu as pltpu

BN_EPS = 1e-5    # PyTorch BatchNorm1d default eps


def _round_up(v, m):
    return (v + m - 1) // m * m


def _vmem_capacity_bytes():
    """Physical VMEM of the local TPU generation (conservative fallback)."""
    try:
        info = pltpu.get_tpu_info()
        cap = int(getattr(info, "vmem_capacity_bytes", 0) or 0)
        if cap > 0:
            return max(32 * 1024 * 1024, min(cap, 128 * 1024 * 1024))
    except Exception:
        pass
    return 64 * 1024 * 1024          # v7x-safe default


# --------------------------------------------------------------------------- #
# Pallas kernel: one fused  relu(x @ Wfold + bfold) [+ x]  tile per grid point.
# --------------------------------------------------------------------------- #
def _ffl_kernel(*refs, residual, reuse_x, tn):
    if residual and not reuse_x:
        x_ref, w_ref, b_ref, r_ref, o_ref = refs
    else:
        x_ref, w_ref, b_ref, o_ref = refs
        r_ref = None

    # Full-K MXU matmul with f32 accumulation (single shot; no K grid axis).
    y = jnp.dot(x_ref[...], w_ref[...], preferred_element_type=jnp.float32)
    # Folded linear-bias + BN shift, then ReLU (Dropout = identity in eval).
    y = jnp.maximum(y + b_ref[...], 0.0)

    if residual:
        if reuse_x:
            # Residual comes from the x tile already resident in VMEM
            # (saves a full extra HBM read of x).
            if x_ref.shape[1] == tn:
                xres = x_ref[...]
            else:
                j = pl.program_id(1)
                xres = x_ref[:, pl.ds(pl.multiple_of(j * tn, 128), tn)]
            y = y + xres.astype(jnp.float32)
        else:
            y = y + r_ref[...].astype(jnp.float32)

    o_ref[...] = y.astype(o_ref.dtype)


# --------------------------------------------------------------------------- #
# One-time (per layer) host-side preparation: BN fold, transpose, cast, pad.
# --------------------------------------------------------------------------- #
def prepare_params(params, *, compute_dtype=jnp.bfloat16):
    """Call once per layer (NOT per forward call)."""
    w, b = params["w"], params["b"]                   # w: (d_out, d_in)
    d_out, d_in = w.shape
    residual = (d_in == d_out)                        # self.residule

    # Fold BatchNorm1d (running stats + affine) into the linear weight / bias:
    #   bn(x @ W.T + b) == x @ (W.T * scale) + (b * scale + shift)
    scale = params["gamma"] / jnp.sqrt(params["rvar"] + BN_EPS)
    w_fold = (w * scale[:, None]).T                   # (d_in, d_out), f32
    b_fold = b * scale + params["beta"] - params["rmean"] * scale

    # --- generation-aware tile budget --------------------------------------
    cap = _vmem_capacity_bytes()                      # 64 MiB v7x / 128 MiB v5e,v6e
    vmem_limit = int(cap * 0.9)                       # raise the scoped VMEM limit
    budget = int(vmem_limit * 0.75)                   # ~25% headroom for tiles
    itemsize = jnp.dtype(compute_dtype).itemsize

    def _align(d):                                    # 256-align for the 2x256x256
        return 256 if d >= 256 else 128               # MXU (v6e/v7x); 128 minimum

    k_align, n_align = _align(d_in), _align(d_out)
    k_pad = _round_up(d_in, k_align)                  # full K per tile (no K axis)

    # tn: as wide (lane-dense) as the double-buffered W tile budget allows.
    w_budget = (2 * budget) // 5                      # <= ~40% of budget for W
    max_tn = max(n_align, (w_budget // (2 * k_pad * itemsize)) // n_align * n_align)
    tn = min(_round_up(d_out, n_align), max_tn)
    n_pad = _round_up(d_out, tn)

    w_prep = jnp.pad(w_fold, ((0, k_pad - d_in), (0, n_pad - d_out))
                     ).astype(compute_dtype)
    b_prep = jnp.pad(b_fold.reshape(1, d_out),
                     ((0, 0), (0, n_pad - d_out))).astype(jnp.float32)

    # Reuse the matmul x tile for the residual when padded layouts coincide.
    reuse_x = residual and (k_pad == n_pad) and (k_pad % tn == 0)

    return dict(w=w_prep, b=b_prep, d_in=d_in, d_out=d_out,
                k_pad=k_pad, n_pad=n_pad, tn=tn,
                residual=residual, reuse_x=reuse_x,
                compute_dtype=compute_dtype, itemsize=itemsize,
                budget=budget, vmem_limit=vmem_limit)


# --------------------------------------------------------------------------- #
# Forward wrapper.
# --------------------------------------------------------------------------- #
def feed_forward_layer(x, prepared):
    """Eval-mode FeedForwardLayer forward.  x: (B, input_dim)."""
    B, d_in = x.shape
    assert d_in == prepared["d_in"], (d_in, prepared["d_in"])
    d_out = prepared["d_out"]
    k_pad, n_pad, tn = prepared["k_pad"], prepared["n_pad"], prepared["tn"]
    compute_dtype = prepared["compute_dtype"]
    itemsize = prepared["itemsize"]
    residual, reuse_x = prepared["residual"], prepared["reuse_x"]
    sep_res = residual and not reuse_x

    # Choose the batch tile so the double-buffered working set fits the budget.
    per_row = 2 * k_pad * itemsize + 2 * tn * 4        # x tile + f32 out tile
    if sep_res:
        per_row += 2 * tn * 4                          # separate f32 residual tile
    fixed = 2 * k_pad * tn * itemsize + 2 * tn * 4     # W + bias (double buffered)
    avail = prepared["budget"] - fixed
    if avail < 8 * per_row:
        # TODO(synk): K/N reduction splitting for extremely large feature dims.
        raise ValueError("FeedForwardLayer tile does not fit the VMEM budget")
    tm = min(_round_up(B, 8), (avail // per_row) // 8 * 8)
    b_pad = _round_up(B, tm)

    # Expose >=2 parallel blocks so both v7x TensorCores get work when the
    # whole problem would otherwise collapse to a single grid point.
    if b_pad // tm == 1 and n_pad // tn == 1 and b_pad >= 256 and b_pad % 16 == 0:
        tm = b_pad // 2

    xk = x.astype(compute_dtype)
    if (b_pad, k_pad) != (B, d_in):
        xk = jnp.pad(xk, ((0, b_pad - B), (0, k_pad - d_in)))

    inputs = [xk, prepared["w"], prepared["b"]]
    in_specs = [
        pl.BlockSpec((tm, k_pad), lambda i, j: (i, 0)),   # x: full K, resident per i
        pl.BlockSpec((k_pad, tn), lambda i, j: (0, j)),   # folded W
        pl.BlockSpec((1, tn), lambda i, j: (0, j)),       # folded bias (f32)
    ]
    if sep_res:
        xres = x
        if (b_pad, n_pad) != (B, d_out):
            xres = jnp.pad(x, ((0, b_pad - B), (0, n_pad - d_out)))
        inputs.append(xres)
        in_specs.append(pl.BlockSpec((tm, tn), lambda i, j: (i, j)))

    kernel = functools.partial(_ffl_kernel, residual=residual,
                               reuse_x=reuse_x, tn=tn)
    out = pl.pallas_call(
        kernel,
        out_shape=jax.ShapeDtypeStruct((b_pad, n_pad), jnp.float32),
        grid_spec=pltpu.PrefetchScalarGridSpec(
            num_scalar_prefetch=0,
            grid=(b_pad // tm, n_pad // tn),
            in_specs=in_specs,
            out_specs=pl.BlockSpec((tm, tn), lambda i, j: (i, j)),
        ),
        compiler_params=pltpu.CompilerParams(
            dimension_semantics=("parallel", "parallel"),
            vmem_limit_bytes=prepared["vmem_limit"]),
    )(*inputs)

    if (b_pad, n_pad) != (B, d_out):
        out = out[:B, :d_out]
    return out


# --------------------------------------------------------------------------- #
# Deterministic parameter init (mirrors the module's parameter shapes).
# --------------------------------------------------------------------------- #
def init_params(key, d_in, d_out):
    k1, k2, k3, k4, k5, k6 = jax.random.split(key, 6)
    w = jax.random.normal(k1, (d_out, d_in), jnp.float32) / jnp.sqrt(float(d_in))
    b = 0.1 * jax.random.normal(k2, (d_out,), jnp.float32)
    gamma = 1.0 + 0.1 * jax.random.normal(k3, (d_out,), jnp.float32)
    beta = 0.1 * jax.random.normal(k4, (d_out,), jnp.float32)
    rmean = 0.1 * jax.random.normal(k5, (d_out,), jnp.float32)
    rvar = 1.0 + 0.1 * jax.random.uniform(k6, (d_out,), jnp.float32)
    return dict(w=w, b=b, gamma=gamma, beta=beta, rmean=rmean, rvar=rvar)


# Pure-JAX reference (eval-mode) for correctness checking.
def ref_forward(x, params):
    y = x @ params["w"].T + params["b"]
    y = (y - params["rmean"]) / jnp.sqrt(params["rvar"] + BN_EPS) \
        * params["gamma"] + params["beta"]
    y = jnp.maximum(y, 0.0)                            # ReLU; Dropout = id
    if x.shape[-1] == params["w"].shape[0]:
        return x + y
    return y


if __name__ == "__main__":
    key = jax.random.PRNGKey(0)
    kx, kp1, kp2 = jax.random.split(key, 3)

    # FeedForwardLayer(input_dim=256, output_dim=256, dropout=0.2)  (residual)
    # FeedForwardLayer(input_dim=256, output_dim=128, dropout=0.2)  (no residual)
    B, D_IN, D_HID, D_OUT = 256, 256, 256, 128
    x = jax.random.normal(kx, (B, D_IN), jnp.float32)

    p1 = init_params(kp1, D_IN, D_HID)
    p2 = init_params(kp2, D_HID, D_OUT)

    r1 = ref_forward(x, p1)
    r2 = ref_forward(r1, p2)

    # --- exact float32 compute path -----------------------------------------
    f1 = prepare_params(p1, compute_dtype=jnp.float32)
    f2 = prepare_params(p2, compute_dtype=jnp.float32)
    y1 = feed_forward_layer(x, f1)
    y2 = jax.block_until_ready(feed_forward_layer(y1, f2))
    assert y2.shape == (B, D_OUT), y2.shape
    if not jnp.allclose(y1, r1, atol=1e-4, rtol=1e-4):
        raise AssertionError("Pallas residual layer (f32) does not match reference")
    if not jnp.allclose(y2, r2, atol=1e-4, rtol=1e-4):
        raise AssertionError("Pallas non-residual layer (f32) does not match reference")

    # --- default path: bf16 MXU operands, f32 accumulation / epilogue -------
    h1 = prepare_params(p1)               # compute_dtype defaults to bfloat16
    h2 = prepare_params(p2)
    z1 = feed_forward_layer(x, h1)
    z2 = jax.block_until_ready(feed_forward_layer(z1, h2))
    if not jnp.allclose(z1, r1, atol=1e-1, rtol=1e-1):
        raise AssertionError("bf16 residual layer does not match reference")
    if not jnp.allclose(z2, r2, atol=1e-1, rtol=1e-1):
        raise AssertionError("bf16 non-residual layer does not match reference")

    print("KERNEL_OK")
</pallas_src>

<mosaic_0001>
module attributes {stable_mosaic.version = 11 : i64} {
  func.func @_ffl_kernel(%arg0: i32, %arg1: i32, %arg2: memref<128x256xf32, #tpu.memory_space<vmem>>, %arg3: memref<256x256xf32, #tpu.memory_space<vmem>>, %arg4: memref<1x256xf32, #tpu.memory_space<vmem>>, %arg5: memref<128x256xf32, #tpu.memory_space<vmem>>) attributes {dimension_semantics = [#tpu.dimension_semantics<parallel>, #tpu.dimension_semantics<parallel>], iteration_bounds = array<i64: 2, 1>, scalar_prefetch = 0 : i64, scratch_operands = 0 : i64, tpu.core_type = #tpu.core_type<tc>, window_params = [{transform_indices = @transform_0, window_bounds = array<i64: 128, 256>}, {transform_indices = @transform_1, window_bounds = array<i64: 256, 256>}, {transform_indices = @transform_2, window_bounds = array<i64: 1, 256>}, {transform_indices = @transform_3, window_bounds = array<i64: 128, 256>}]} {
    %c0 = arith.constant 0 : index
    %c0_0 = arith.constant 0 : index
    %0 = vector.load %arg2[%c0, %c0_0] : memref<128x256xf32, #tpu.memory_space<vmem>>, vector<128x256xf32>
    %c0_1 = arith.constant 0 : index
    %c0_2 = arith.constant 0 : index
    %1 = vector.load %arg3[%c0_1, %c0_2] : memref<256x256xf32, #tpu.memory_space<vmem>>, vector<256x256xf32>
    %cst = arith.constant dense<0.000000e+00> : vector<128x256xf32>
    %2 = tpu.matmul %0, %1, %cst {dimension_numbers = #tpu.dot_dimension_numbers<[1], [0], [0], [1], [0, 0, 1, 1], [], []>} : vector<128x256xf32>, vector<256x256xf32>, vector<128x256xf32> -> vector<128x256xf32>
    %c0_3 = arith.constant 0 : index
    %c0_4 = arith.constant 0 : index
    %3 = vector.load %arg4[%c0_3, %c0_4] : memref<1x256xf32, #tpu.memory_space<vmem>>, vector<1x256xf32>
    %4 = vector.broadcast %3 : vector<1x256xf32> to vector<128x256xf32>
    %5 = arith.addf %2, %4 : vector<128x256xf32>
    %cst_5 = arith.constant 0.000000e+00 : f32
    %6 = vector.broadcast %cst_5 : f32 to vector<128x256xf32>
    %7 = arith.maximumf %5, %6 : vector<128x256xf32>
    %c0_6 = arith.constant 0 : index
    %c0_7 = arith.constant 0 : index
    %8 = vector.load %arg2[%c0_6, %c0_7] : memref<128x256xf32, #tpu.memory_space<vmem>>, vector<128x256xf32>
    %9 = arith.addf %7, %8 : vector<128x256xf32>
    %c0_8 = arith.constant 0 : index
    %c0_9 = arith.constant 0 : index
    %10 = vector.load %arg5[%c0_8, %c0_9] : memref<128x256xf32, #tpu.memory_space<vmem>>, vector<128x256xf32>
    tpu.vector_store %arg5[%c0_8, %c0_9], %9 {strides = array<i32>} : memref<128x256xf32, #tpu.memory_space<vmem>>, vector<128x256xf32>,
    return
  }
  func.func @transform_0(%arg0: i32, %arg1: i32) -> (i32, i32) {
    %c0_i32 = arith.constant 0 : i32
    %c0_i32_0 = arith.constant 0 : i32
    return %arg0, %c0_i32 : i32, i32
  }
  func.func @transform_1(%arg0: i32, %arg1: i32) -> (i32, i32) {
    %c0_i32 = arith.constant 0 : i32
    %c0_i32_0 = arith.constant 0 : i32
    return %c0_i32, %arg1 : i32, i32
  }
  func.func @transform_2(%arg0: i32, %arg1: i32) -> (i32, i32) {
    %c0_i32 = arith.constant 0 : i32
    %c0_i32_0 = arith.constant 0 : i32
    return %c0_i32, %arg1 : i32, i32
  }
  func.func @transform_3(%arg0: i32, %arg1: i32) -> (i32, i32) {
    %c0_i32 = arith.constant 0 : i32
    return %arg0, %arg1 : i32, i32
  }
}

</mosaic_0001>

<llo_original>
// kernel: tpu_custom_call.1
$region0: #{tpu_custom_call.1}
  #allocation0 [shape = 'u32[]', space=smem, size = 0x4, offset = 0x4, fixed_abs, tag = 'smem constant byte address 0x4 - core index']
  #allocation1 [shape = 'u32[144,128]{1,0:T(1,128)}', space=vmem, size = 0x12000, scoped, tag = 'internal scratch']
  %s0 = inlined_call_operand.hbm [shape: f32[256,256], index: 0, kind: input, shape index: {}]
  %s1 = inlined_call_operand.hbm [shape: f32[256,256], index: 1, kind: input, shape index: {}]
  %s2 = inlined_call_operand.vmem [shape: f32[1,256], index: 2, kind: input, shape index: {}]
  %s3 = inlined_call_operand.hbm [shape: f32[256,256], index: 3, kind: output, shape index: {}]
  %s4 = sld [smem:[#allocation0]]
  $region53: #{tpu_custom_call.1} parent=0
    _
  %s6 = ssub.s32 1, %s4
  %s7 = scalar_select 0, %s6, %s4
  $region1: #{tpu_custom_call.1} parent=0
    #allocation2 [shape = 'u8[262144]{0}', space=vmem, size = 0x40000, scoped, tag = 'input window, operand 0']
    #allocation3 [shape = 's32[2]{0}', space=sflag, size = 0x8, scoped, tag = 'scoped memory for tpu_custom_call.1']
    #allocation4 [shape = 's32[2]{0}', space=sflag, size = 0x8, scoped, tag = 'scoped memory for tpu_custom_call.1']
    #allocation5 [shape = 'u8[262144]{0}', space=vmem, size = 0x40000, scoped, tag = 'input window, operand 1, single buffered']
    #allocation6 [shape = 's32[1]{0}', space=sflag, size = 0x4, scoped, tag = 'scoped memory for tpu_custom_call.1']
    #allocation7 [shape = 'u8[262144]{0}', space=vmem, size = 0x40000, scoped, tag = 'output window, operand 0']
    %8 = vsyncpa [#allocation3], 0
    %s9 = scalar_lea.sflag [#allocation3], 1
    %10 = vsyncpa %s9, 0
    %11 = vsyncpa [#allocation6], 0
    %12 = vsyncpa [#allocation4], 0
    %s13 = scalar_lea.sflag [#allocation4], 1
    %14 = vsyncpa %s13, 0
    loop: start=0, step=1, limit=4
    $region2: #{tpu_custom_call.1} parent=1 // loop_pre_header
      _
    $region3: #{tpu_custom_call.1} parent=1 // loop_header
      %s16 = sphi 0, %s20
      %p17 = scmp.ge.s32.totalorder %s16, 4
      %s23 = sphi 0, %s35
      %s24 = sphi 0, %s31
      %s25 = sphi 0, %s23
      %s26 = sphi 0, %s24
      %s27 = sphi 0, %s25
      %s28 = sphi 0, %s26
      %s38 = sphi 0, %s40
      %s41 = sphi 0, %s38
      %s42 = sphi 0, %s41
      %s58 = sphi 0, %s42
      %s64 = sphi 0, %s66
      %s67 = sphi 0, %s64
      %s68 = sphi 0, %s67
      %s84 = sphi 0, %s68
      %s90 = sphi 0, %s92
      %s93 = sphi 0, %s90
      %s94 = sphi 0, %s93
      %s110 = sphi 0, %s94
      %s118 = sphi 0, %s120
      %s121 = sphi 0, %s118
      %s122 = sphi 0, %s121
      %s138 = sphi 0, %s122
    $region4: #{tpu_custom_call.1} parent=1 // loop_header_branch
      %19 = sbr.rel (%p17) target = $region8
    $region5: #{tpu_custom_call.1} parent=1 // loop_body
      %s21 = ssub.s32 %s16, 1
      %s22 = ssub.s32 %s16, 2
      %s29 = sadd.s32 1, %s24
      %p30 = scmp.ge.s32.totalorder %s29, 1
      %s31 = scalar_select %p30, 0, %s29
      %s32 = sadd.s32 1, %s23
      %s33 = scalar_select %p30, %s32, %s23
      %p34 = scmp.ge.s32.totalorder %s33, 2
      %s35 = scalar_select %p34, 0, %s33
      %s36 = ssub.s32 %s23, %s35
      %p37 = scmp.eq.s32.totalorder %s36, 0
      %s39 = sadd.s32 %s38, 1
      %s40 = scalar_select %p37, %s38, %s39
      %p43 = pneg %p37
      %p44 = scmp.eq.s32.totalorder %s16, 1
      %p45 = por %p43, %p44
      %p46 = scmp.ne.s32.totalorder %s38, %s41
      %p47 = scmp.eq.s32.totalorder %s16, 0
      %p48 = por %p46, %p47
      %p49 = scmp.ne.s32.totalorder %s38, %s41
      %p50 = scmp.eq.s32.totalorder %s21, 1
      %p51 = por %p49, %p50
      %p52 = scmp.ne.s32.totalorder %s41, %s42
      %p53 = scmp.eq.s32.totalorder %s21, 0
      %p54 = por %p52, %p53
      %p55 = scmp.ne.s32.totalorder %s41, %s42
      %p56 = scmp.eq.s32.totalorder %s22, 1
      %p57 = por %p55, %p56
      %p59 = scmp.ne.s32.totalorder %s42, %s58
      %p60 = scmp.eq.s32.totalorder %s22, 0
      %p61 = por %p59, %p60
      %s62 = ssub.s32 %s24, %s31
      %p63 = scmp.eq.s32.totalorder %s62, 0
      %s65 = sadd.s32 %s64, 1
      %s66 = scalar_select %p63, %s64, %s65
      %p69 = pneg %p63
      %p70 = scmp.eq.s32.totalorder %s16, 1
      %p71 = por %p69, %p70
      %p72 = scmp.ne.s32.totalorder %s64, %s67
      %p73 = scmp.eq.s32.totalorder %s16, 0
      %p74 = por %p72, %p73
      %p75 = scmp.ne.s32.totalorder %s64, %s67
      %p76 = scmp.eq.s32.totalorder %s21, 1
      %p77 = por %p75, %p76
      %p78 = scmp.ne.s32.totalorder %s67, %s68
      %p79 = scmp.eq.s32.totalorder %s21, 0
      %p80 = por %p78, %p79
      %p81 = scmp.ne.s32.totalorder %s67, %s68
      %p82 = scmp.eq.s32.totalorder %s22, 1
      %p83 = por %p81, %p82
      %p85 = scmp.ne.s32.totalorder %s68, %s84
      %p86 = scmp.eq.s32.totalorder %s22, 0
      %p87 = por %p85, %p86
      %s88 = ssub.s32 %s24, %s31
      %p89 = scmp.eq.s32.totalorder %s88, 0
      %s91 = sadd.s32 %s90, 1
      %s92 = scalar_select %p89, %s90, %s91
      %p95 = pneg %p89
      %p96 = scmp.eq.s32.totalorder %s16, 1
      %p97 = por %p95, %p96
      %p98 = scmp.ne.s32.totalorder %s90, %s93
      %p99 = scmp.eq.s32.totalorder %s16, 0
      %p100 = por %p98, %p99
      %p101 = scmp.ne.s32.totalorder %s90, %s93
      %p102 = scmp.eq.s32.totalorder %s21, 1
      %p103 = por %p101, %p102
      %p104 = scmp.ne.s32.totalorder %s93, %s94
      %p105 = scmp.eq.s32.totalorder %s21, 0
      %p106 = por %p104, %p105
      %p107 = scmp.ne.s32.totalorder %s93, %s94
      %p108 = scmp.eq.s32.totalorder %s22, 1
      %p109 = por %p107, %p108
      %p111 = scmp.ne.s32.totalorder %s94, %s110
      %p112 = scmp.eq.s32.totalorder %s22, 0
      %p113 = por %p111, %p112
      %s114 = ssub.s32 %s23, %s35
      %s115 = ssub.s32 %s24, %s31
      %s116 = sor.u32 %s114, %s115
      %p117 = scmp.eq.s32.totalorder %s116, 0
      %s119 = sadd.s32 %s118, 1
      %s120 = scalar_select %p117, %s118, %s119
      %p123 = pneg %p117
      %p124 = scmp.eq.s32.totalorder %s16, 1
      %p125 = por %p123, %p124
      %p126 = scmp.ne.s32.totalorder %s118, %s121
      %p127 = scmp.eq.s32.totalorder %s16, 0
      %p128 = por %p126, %p127
      %p129 = scmp.ne.s32.totalorder %s118, %s121
      %p130 = scmp.eq.s32.totalorder %s21, 1
      %p131 = por %p129, %p130
      %p132 = scmp.ne.s32.totalorder %s121, %s122
      %p133 = scmp.eq.s32.totalorder %s21, 0
      %p134 = por %p132, %p133
      %p135 = scmp.ne.s32.totalorder %s121, %s122
      %p136 = scmp.eq.s32.totalorder %s22, 1
      %p137 = por %p135, %p136
      %p139 = scmp.ne.s32.totalorder %s122, %s138
      %p140 = scmp.eq.s32.totalorder %s22, 0
      %p141 = por %p139, %p140
      %p142 = scmp.le.s32.totalorder 1, %s16
      %p143 = scmp.lt.s32.totalorder %s16, 3
      %p144 = pnand %p142, %p143
      %p145 = pneg %p144
      // Predicated region
      $region9: #{tpu_custom_call.1} parent=5 // pred_check
        _
      $region10: #{tpu_custom_call.1} parent=5 // pred_check_branch
        %147 = sbr.rel (%p144) target = $region12
      $region11: #{tpu_custom_call.1} parent=5 // pred_region
        %s148 = ssub.s32 %s16, 1
        // Predicated region
        $region13: #{tpu_custom_call.1} parent=11 // pred_check
          %p149 = pneg %p80
        $region14: #{tpu_custom_call.1} parent=11 // pred_check_branch
          %151 = sbr.rel (%p149) target = $region16
        $region15: #{tpu_custom_call.1} parent=11 // pred_region
          %s152 = smul.u32 2, %s26
          %s154 = ssub.s32 8192, 8192
          %155 = vsyncadd [#allocation6], %s154
          %s156 = smul.addr %s152, 128
          %s157 = scalar_lea.hbm %s1, %s156
          %s158 = sshll.u32 [#allocation5], 4
          %s159 = int_to_ptr.vmem [resolvable:$true] %s158
          %164 = dma.hbm_to_vmem [thread:$0]  %s157, 8192, %s159, [#allocation6], 256, 256, 16
        $region16: #{tpu_custom_call.1} parent=11 // pred_fallthru
          _
        // Predicated region
        $region17: #{tpu_custom_call.1} parent=11 // pred_check
          %p165 = pneg %p106
        $region18: #{tpu_custom_call.1} parent=11 // pred_check_branch
          %167 = sbr.rel (%p165) target = $region20
        $region19: #{tpu_custom_call.1} parent=11 // pred_region
          %s168 = smul.u32 2, %s26
          %p169 = scmp.lt.s32.totalorder %s168, 1
          %s170 = scalar_select %p169, %s168, 1
          %s171 = scalar_lea.vmem %s2, %s170
          %s172 = smul.u32 2, %s26
        $region20: #{tpu_custom_call.1} parent=11 // pred_fallthru
          _
      $region12: #{tpu_custom_call.1} parent=5 // pred_fallthru
        _
      %p173 = scmp.lt.s32.totalorder %s16, 2
      // Predicated region
      $region21: #{tpu_custom_call.1} parent=5 // pred_check
        %p174 = pneg %p173
      $region22: #{tpu_custom_call.1} parent=5 // pred_check_branch
        %176 = sbr.rel (%p174) target = $region24
      $region23: #{tpu_custom_call.1} parent=5 // pred_region
        // Predicated region
        $region25: #{tpu_custom_call.1} parent=23 // pred_check
          %p177 = pneg %p48
        $region26: #{tpu_custom_call.1} parent=23 // pred_check_branch
          %179 = sbr.rel (%p177) target = $region28
        $region27: #{tpu_custom_call.1} parent=23 // pred_region
          %s180 = sand.u32 %s38, 1
          %s181 = scalar_lea.sflag [#allocation3], %s180
          %s182 = sand.u32 %s38, 1
          %s183 = smul.addr %s182, 256
          %s184 = scalar_lea.vmem [#allocation2], %s183
          %s185 = smul.u32 16, %s23
          %s187 = ssub.s32 4096, 4096
          %188 = vsyncadd %s181, %s187
          %s189 = smul.addr %s185, 2
          %s190 = smul.addr %s189, 128
          %s191 = scalar_lea.hbm %s0, %s190
          %s192 = sshll.u32 %s184, 4
          %s193 = int_to_ptr.vmem [resolvable:$true] %s192
          %198 = dma.hbm_to_vmem [thread:$0]  %s191, 4096, %s193, %s181, 256, 256, 16
        $region28: #{tpu_custom_call.1} parent=23 // pred_fallthru
          _
      $region24: #{tpu_custom_call.1} parent=5 // pred_fallthru
        _
      %p199 = scmp.le.s32.totalorder 1, %s16
      %p200 = scmp.lt.s32.totalorder %s16, 3
      %p201 = pnand %p199, %p200
      %p202 = pneg %p201
      // Predicated region
      $region29: #{tpu_custom_call.1} parent=5 // pred_check
        _
      $region30: #{tpu_custom_call.1} parent=5 // pred_check_branch
        %204 = sbr.rel (%p201) target = $region32
      $region31: #{tpu_custom_call.1} parent=5 // pred_region
        %s205 = ssub.s32 %s16, 1
        %s206 = sand.u32 %s41, 1
        %s207 = scalar_lea.sflag [#allocation3], %s206
        %s208 = sand.u32 %s41, 1
        %s209 = smul.addr %s208, 256
        %s210 = scalar_lea.vmem [#allocation2], %s209
        // Predicated region
        $region33: #{tpu_custom_call.1} parent=31 // pred_check
          %p211 = pneg %p54
        $region34: #{tpu_custom_call.1} parent=31 // pred_check_branch
          %213 = sbr.rel (%p211) target = $region36
        $region35: #{tpu_custom_call.1} parent=31 // pred_region
          %214 = dma.done %s207, 4096
        $region36: #{tpu_custom_call.1} parent=31 // pred_fallthru
          _
        // Predicated region
        $region37: #{tpu_custom_call.1} parent=31 // pred_check
          %p215 = pneg %p80
        $region38: #{tpu_custom_call.1} parent=31 // pred_check_branch
          %217 = sbr.rel (%p215) target = $region40
        $region39: #{tpu_custom_call.1} parent=31 // pred_region
          %218 = dma.done [#allocation6], 8192
        $region40: #{tpu_custom_call.1} parent=31 // pred_fallthru
          _
        %s219 = sand.u32 %s41, 1
        %s220 = scalar_lea.sflag [#allocation3], %s219
        %s221 = sand.u32 %s41, 1
        %s222 = smul.addr %s221, 256
        %s223 = scalar_lea.vmem [#allocation2], %s222
        %p224 = pneg %p54
        %p225 = pneg %p51
        %p226 = pneg %p80
        %p227 = pneg %p77
        %s228 = smul.u32 2, %s26
        %p229 = scmp.lt.s32.totalorder %s228, 1
        %s230 = scalar_select %p229, %s228, 1
        %s231 = scalar_lea.vmem %s2, %s230
        %p232 = pneg %p106
        %p233 = pneg %p103
        %p234 = pneg %p134
        %p235 = pneg %p131
        %s236 = sand.u32 %s121, 1
        %s237 = scalar_lea.sflag [#allocation4], %s236
        %s238 = sand.u32 %s121, 1
        %s239 = smul.addr %s238, 256
        %s240 = scalar_lea.vmem [#allocation7], %s239
        %s241 = smul.u32 16, %s25
        %s242 = smul.u32 2, %s26
        %s243 = smul.u32 2, %s26
        %p244 = scmp.lt.s32.totalorder %s243, 1
        %s245 = scalar_select %p244, %s243, 1
        %s246 = scalar_lea.vmem %s2, %s245
        %s247 = smul.u32 2, %s26
        %s248 = smul.u32 16, %s25
        %s249 = smul.u32 2, %s26
        %v250 = vld [vmem:[%s210] sm:$0xff]
        %v251 = vld [vmem:[%s210 + $0x8] sm:$0xff]
        %v252 = vld [vmem:[%s210 + $0x10] sm:$0xff]
        %v253 = vld [vmem:[%s210 + $0x18] sm:$0xff]
        %v254 = vld [vmem:[%s210 + $0x20] sm:$0xff]
        %v255 = vld [vmem:[%s210 + $0x28] sm:$0xff]
        %v256 = vld [vmem:[%s210 + $0x30] sm:$0xff]
        %v257 = vld [vmem:[%s210 + $0x38] sm:$0xff]
        %v258 = vld [vmem:[%s210 + $0x40] sm:$0xff]
        %v259 = vld [vmem:[%s210 + $0x48] sm:$0xff]
        %v260 = vld [vmem:[%s210 + $0x50] sm:$0xff]
        %v261 = vld [vmem:[%s210 + $0x58] sm:$0xff]
        %v262 = vld [vmem:[%s210 + $0x60] sm:$0xff]
        %v263 = vld [vmem:[%s210 + $0x68] sm:$0xff]
        %v264 = vld [vmem:[%s210 + $0x70] sm:$0xff]
        %v265 = vld [vmem:[%s210 + $0x78] sm:$0xff]
        %v266 = vld [vmem:[%s210 + $0x80] sm:$0xff]
        %v267 = vld [vmem:[%s210 + $0x88] sm:$0xff]
        %v268 = vld [vmem:[%s210 + $0x90] sm:$0xff]
        %v269 = vld [vmem:[%s210 + $0x98] sm:$0xff]
        %v270 = vld [vmem:[%s210 + $0xa0] sm:$0xff]
        %v271 = vld [vmem:[%s210 + $0xa8] sm:$0xff]
        %v272 = vld [vmem:[%s210 + $0xb0] sm:$0xff]
        %v273 = vld [vmem:[%s210 + $0xb8] sm:$0xff]
        %v274 = vld [vmem:[%s210 + $0xc0] sm:$0xff]
        %v275 = vld [vmem:[%s210 + $0xc8] sm:$0xff]
        %v276 = vld [vmem:[%s210 + $0xd0] sm:$0xff]
        %v277 = vld [vmem:[%s210 + $0xd8] sm:$0xff]
        %v278 = vld [vmem:[%s210 + $0xe0] sm:$0xff]
        %v279 = vld [vmem:[%s210 + $0xe8] sm:$0xff]
        %v280 = vld [vmem:[%s210 + $0xf0] sm:$0xff]
        %v281 = vld [vmem:[%s210 + $0xf8] sm:$0xff]
        %v282 = vld [vmem:[#allocation5] sm:$0xff]
        %v283 = vld [vmem:[#allocation5 + $0x8] sm:$0xff]
        %v284 = vld [vmem:[#allocation5 + $0x10] sm:$0xff]
        %v285 = vld [vmem:[#allocation5 + $0x18] sm:$0xff]
        %v286 = vld [vmem:[#allocation5 + $0x20] sm:$0xff]
        %v287 = vld [vmem:[#allocation5 + $0x28] sm:$0xff]
        %v288 = vld [vmem:[#allocation5 + $0x30] sm:$0xff]
        %v289 = vld [vmem:[#allocation5 + $0x38] sm:$0xff]
        %v290 = vld [vmem:[#allocation5 + $0x40] sm:$0xff]
        %v291 = vld [vmem:[#allocation5 + $0x48] sm:$0xff]
        %v292 = vld [vmem:[#allocation5 + $0x50] sm:$0xff]
        %v293 = vld [vmem:[#allocation5 + $0x58] sm:$0xff]
        %v294 = vld [vmem:[#allocation5 + $0x60] sm:$0xff]
        %v295 = vld [vmem:[#allocation5 + $0x68] sm:$0xff]
        %v296 = vld [vmem:[#allocation5 + $0x70] sm:$0xff]
        %v297 = vld [vmem:[#allocation5 + $0x78] sm:$0xff]
        %v298 = vld [vmem:[#allocation5 + $0x80] sm:$0xff]
        %v299 = vld [vmem:[#allocation5 + $0x88] sm:$0xff]
        %v300 = vld [vmem:[#allocation5 + $0x90] sm:$0xff]
        %v301 = vld [vmem:[#allocation5 + $0x98] sm:$0xff]
        %v302 = vld [vmem:[#allocation5 + $0xa0] sm:$0xff]
        %v303 = vld [vmem:[#allocation5 + $0xa8] sm:$0xff]
        %v304 = vld [vmem:[#allocation5 + $0xb0] sm:$0xff]
        %v305 = vld [vmem:[#allocation5 + $0xb8] sm:$0xff]
        %v306 = vld [vmem:[#allocation5 + $0xc0] sm:$0xff]
        %v307 = vld [vmem:[#allocation5 + $0xc8] sm:$0xff]
        %v308 = vld [vmem:[#allocation5 + $0xd0] sm:$0xff]
        %v309 = vld [vmem:[#allocation5 + $0xd8] sm:$0xff]
        %v310 = vld [vmem:[#allocation5 + $0xe0] sm:$0xff]
        %v311 = vld [vmem:[#allocation5 + $0xe8] sm:$0xff]
        %v312 = vld [vmem:[#allocation5 + $0xf0] sm:$0xff]
        %v313 = vld [vmem:[#allocation5 + $0xf8] sm:$0xff]
        %v314 = vld [vmem:[#allocation5 + $0x100] sm:$0xff]
        %v315 = vld [vmem:[#allocation5 + $0x108] sm:$0xff]
        %v316 = vld [vmem:[#allocation5 + $0x110] sm:$0xff]
        %v317 = vld [vmem:[#allocation5 + $0x118] sm:$0xff]
        %v318 = vld [vmem:[#allocation5 + $0x120] sm:$0xff]
        %v319 = vld [vmem:[#allocation5 + $0x128] sm:$0xff]
        %v320 = vld [vmem:[#allocation5 + $0x130] sm:$0xff]
        %v321 = vld [vmem:[#allocation5 + $0x138] sm:$0xff]
        %v322 = vld [vmem:[#allocation5 + $0x140] sm:$0xff]
        %v323 = vld [vmem:[#allocation5 + $0x148] sm:$0xff]
        %v324 = vld [vmem:[#allocation5 + $0x150] sm:$0xff]
        %v325 = vld [vmem:[#allocation5 + $0x158] sm:$0xff]
        %v326 = vld [vmem:[#allocation5 + $0x160] sm:$0xff]
        %v327 = vld [vmem:[#allocation5 + $0x168] sm:$0xff]
        %v328 = vld [vmem:[#allocation5 + $0x170] sm:$0xff]
        %v329 = vld [vmem:[#allocation5 + $0x178] sm:$0xff]
        %v330 = vld [vmem:[#allocation5 + $0x180] sm:$0xff]
        %v331 = vld [vmem:[#allocation5 + $0x188] sm:$0xff]
        %v332 = vld [vmem:[#allocation5 + $0x190] sm:$0xff]
        %v333 = vld [vmem:[#allocation5 + $0x198] sm:$0xff]
        %v334 = vld [vmem:[#allocation5 + $0x1a0] sm:$0xff]
        %v335 = vld [vmem:[#allocation5 + $0x1a8] sm:$0xff]
        %v336 = vld [vmem:[#allocation5 + $0x1b0] sm:$0xff]
        %v337 = vld [vmem:[#allocation5 + $0x1b8] sm:$0xff]
        %v338 = vld [vmem:[#allocation5 + $0x1c0] sm:$0xff]
        %v339 = vld [vmem:[#allocation5 + $0x1c8] sm:$0xff]
        %v340 = vld [vmem:[#allocation5 + $0x1d0] sm:$0xff]
        %v341 = vld [vmem:[#allocation5 + $0x1d8] sm:$0xff]
        %v342 = vld [vmem:[#allocation5 + $0x1e0] sm:$0xff]
        %v343 = vld [vmem:[#allocation5 + $0x1e8] sm:$0xff]
        %v344 = vld [vmem:[#allocation5 + $0x1f0] sm:$0xff]
        %v345 = vld [vmem:[#allocation5 + $0x1f8] sm:$0xff]
        %v346 = vld [vmem:[%s246] sm:$0x3]
        %v348 = vlaneseq
        %v349 = vshrl.u32 %v348, 7
        %v350 = vsub.s32 0, %v349
        %v351 = vrot.slane %v346, %v350
        %v352 = vlaneseq
        %v353 = vshrl.u32 %v352, 7
        %v354 = vsub.s32 1, %v353
        %v355 = vrot.slane %v346, %v354
        %358 = vmatprep.subr.mxu0 %v313
        %359 = vmatpush1.msra.mxu0 %v312
        %360 = vmatprep.subr.mxu0 %v311
        %361 = vmatpush1.msra.mxu0 %v310
        %362 = vmatprep.subr.mxu0 %v309
        %363 = vmatpush1.msra.mxu0 %v308
        %364 = vmatprep.subr.mxu0 %v307
        %365 = vmatpush1.msra.mxu0 %v306
        %366 = vmatprep.subr.mxu0 %v305
        %367 = vmatpush1.msra.mxu0 %v304
        %368 = vmatprep.subr.mxu0 %v303
        %369 = vmatpush1.msra.mxu0 %v302
        %370 = vmatprep.subr.mxu0 %v301
        %371 = vmatpush1.msra.mxu0 %v300
        %372 = vmatprep.subr.mxu0 %v299
        %373 = vmatpush1.msra.mxu0 %v298
        %374 = vmatprep.subr.mxu0 %v297
        %375 = vmatpush1.msra.mxu0 %v296
        %376 = vmatprep.subr.mxu0 %v295
        %377 = vmatpush1.msra.mxu0 %v294
        %378 = vmatprep.subr.mxu0 %v293
        %379 = vmatpush1.msra.mxu0 %v292
        %380 = vmatprep.subr.mxu0 %v291
        %381 = vmatpush1.msra.mxu0 %v290
        %382 = vmatprep.subr.mxu0 %v289
        %383 = vmatpush1.msra.mxu0 %v288
        %384 = vmatprep.subr.mxu0 %v287
        %385 = vmatpush1.msra.mxu0 %v286
        %386 = vmatprep.subr.mxu0 %v285
        %387 = vmatpush1.msra.mxu0 %v284
        %388 = vmatprep.subr.mxu0 %v283
        %389 = vmatpush1.msra.mxu0 %v282
        %390 = vmatprep.subr.mxu0 %v345
        %391 = vmatpush2.msra.mxu0 %v344
        %392 = vmatprep.subr.mxu0 %v343
        %393 = vmatpush2.msra.mxu0 %v342
        %394 = vmatprep.subr.mxu0 %v341
        %395 = vmatpush2.msra.mxu0 %v340
        %396 = vmatprep.subr.mxu0 %v339
        %397 = vmatpush2.msra.mxu0 %v338
        %398 = vmatprep.subr.mxu0 %v337
        %399 = vmatpush2.msra.mxu0 %v336
        %400 = vmatprep.subr.mxu0 %v335
        %401 = vmatpush2.msra.mxu0 %v334
        %402 = vmatprep.subr.mxu0 %v333
        %403 = vmatpush2.msra.mxu0 %v332
        %404 = vmatprep.subr.mxu0 %v331
        %405 = vmatpush2.msra.mxu0 %v330
        %406 = vmatprep.subr.mxu0 %v329
        %407 = vmatpush2.msra.mxu0 %v328
        %408 = vmatprep.subr.mxu0 %v327
        %409 = vmatpush2.msra.mxu0 %v326
        %410 = vmatprep.subr.mxu0 %v325
        %411 = vmatpush2.msra.mxu0 %v324
        %412 = vmatprep.subr.mxu0 %v323
        %413 = vmatpush2.msra.mxu0 %v322
        %414 = vmatprep.subr.mxu0 %v321
        %415 = vmatpush2.msra.mxu0 %v320
        %416 = vmatprep.subr.mxu0 %v319
        %417 = vmatpush2.msra.mxu0 %v318
        %418 = vmatprep.subr.mxu0 %v317
        %419 = vmatpush2.msra.mxu0 %v316
        %420 = vmatprep.subr.mxu0 %v315
        %421 = vmatpush2.msra.mxu0 %v314
        %422 = vmatprep.mubr.f32.mxu0 %v251
        %423 = vmatmul.mubr.f32.gmra.mxu0 %v250
        %v424 = vpop.f32.mrf.mxu0
        %v425 = vadd.f32 %v351, %v424
        %v426 = vpop.f32.mrf.mxu0
        %v427 = vadd.f32 %v355, %v426
        %428 = vmatprep.mubr.f32.mxu0 %v253
        %429 = vmatmul.mubr.f32.gmra.mxu0 %v252
        %v430 = vpop.f32.mrf.mxu0
        %v431 = vadd.f32 %v351, %v430
        %v432 = vpop.f32.mrf.mxu0
        %v433 = vadd.f32 %v355, %v432
        %434 = vmatprep.mubr.f32.mxu0 %v255
        %435 = vmatmul.mubr.f32.gmra.mxu0 %v254
        %v436 = vpop.f32.mrf.mxu0
        %v437 = vadd.f32 %v351, %v436
        %v438 = vpop.f32.mrf.mxu0
        %v439 = vadd.f32 %v355, %v438
        %440 = vmatprep.mubr.f32.mxu0 %v257
        %441 = vmatmul.mubr.f32.gmra.mxu0 %v256
        %v442 = vpop.f32.mrf.mxu0
        %v443 = vadd.f32 %v351, %v442
        %v444 = vpop.f32.mrf.mxu0
        %v445 = vadd.f32 %v355, %v444
        %446 = vmatprep.mubr.f32.mxu0 %v259
        %447 = vmatmul.mubr.f32.gmra.mxu0 %v258
        %v448 = vpop.f32.mrf.mxu0
        %v449 = vadd.f32 %v351, %v448
        %v450 = vpop.f32.mrf.mxu0
        %v451 = vadd.f32 %v355, %v450
        %452 = vmatprep.mubr.f32.mxu0 %v261
        %453 = vmatmul.mubr.f32.gmra.mxu0 %v260
        %v454 = vpop.f32.mrf.mxu0
        %v455 = vadd.f32 %v351, %v454
        %v456 = vpop.f32.mrf.mxu0
        %v457 = vadd.f32 %v355, %v456
        %458 = vmatprep.mubr.f32.mxu0 %v263
        %459 = vmatmul.mubr.f32.gmra.mxu0 %v262
        %v460 = vpop.f32.mrf.mxu0
        %v461 = vadd.f32 %v351, %v460
        %v462 = vpop.f32.mrf.mxu0
        %v463 = vadd.f32 %v355, %v462
        %464 = vmatprep.mubr.f32.mxu0 %v265
        %465 = vmatmul.mubr.f32.gmra.mxu0 %v264
        %v466 = vpop.f32.mrf.mxu0
        %v467 = vadd.f32 %v351, %v466
        %v468 = vpop.f32.mrf.mxu0
        %v469 = vadd.f32 %v355, %v468
        %470 = vmatprep.mubr.f32.mxu0 %v267
        %471 = vmatmul.mubr.f32.gmra.mxu0 %v266
        %v472 = vpop.f32.mrf.mxu0
        %v473 = vadd.f32 %v351, %v472
        %v474 = vpop.f32.mrf.mxu0
        %v475 = vadd.f32 %v355, %v474
        %476 = vmatprep.mubr.f32.mxu0 %v269
        %477 = vmatmul.mubr.f32.gmra.mxu0 %v268
        %v478 = vpop.f32.mrf.mxu0
        %v479 = vadd.f32 %v351, %v478
        %v480 = vpop.f32.mrf.mxu0
        %v481 = vadd.f32 %v355, %v480
        %482 = vmatprep.mubr.f32.mxu0 %v271
        %483 = vmatmul.mubr.f32.gmra.mxu0 %v270
        %v484 = vpop.f32.mrf.mxu0
        %v485 = vadd.f32 %v351, %v484
        %v486 = vpop.f32.mrf.mxu0
        %v487 = vadd.f32 %v355, %v486
        %488 = vmatprep.mubr.f32.mxu0 %v273
        %489 = vmatmul.mubr.f32.gmra.mxu0 %v272
        %v490 = vpop.f32.mrf.mxu0
        %v491 = vadd.f32 %v351, %v490
        %v492 = vpop.f32.mrf.mxu0
        %v493 = vadd.f32 %v355, %v492
        %494 = vmatprep.mubr.f32.mxu0 %v275
        %495 = vmatmul.mubr.f32.gmra.mxu0 %v274
        %v496 = vpop.f32.mrf.mxu0
        %v497 = vadd.f32 %v351, %v496
        %v498 = vpop.f32.mrf.mxu0
        %v499 = vadd.f32 %v355, %v498
        %500 = vmatprep.mubr.f32.mxu0 %v277
        %501 = vmatmul.mubr.f32.gmra.mxu0 %v276
        %v502 = vpop.f32.mrf.mxu0
        %v503 = vadd.f32 %v351, %v502
        %v504 = vpop.f32.mrf.mxu0
        %v505 = vadd.f32 %v355, %v504
        %506 = vmatprep.mubr.f32.mxu0 %v279
        %507 = vmatmul.mubr.f32.gmra.mxu0 %v278
        %v508 = vpop.f32.mrf.mxu0
        %v509 = vadd.f32 %v351, %v508
        %v510 = vpop.f32.mrf.mxu0
        %v511 = vadd.f32 %v355, %v510
        %512 = vmatprep.mubr.f32.mxu0 %v281
        %513 = vmatmul.mubr.f32.gmra.mxu0 %v280
        %v514 = vpop.f32.mrf.mxu0
        %v515 = vadd.f32 %v351, %v514
        %v516 = vpop.f32.mrf.mxu0
        %v517 = vadd.f32 %v355, %v516
        %518 = vdwg.mxu0
        %v519 = vmax.f32 %v425, 0.0
        %v520 = vmax.f32 %v427, 0.0
        %v521 = vmax.f32 %v431, 0.0
        %v522 = vmax.f32 %v433, 0.0
        %v523 = vmax.f32 %v437, 0.0
        %v524 = vmax.f32 %v439, 0.0
        %v525 = vmax.f32 %v443, 0.0
        %v526 = vmax.f32 %v445, 0.0
        %v527 = vmax.f32 %v449, 0.0
        %v528 = vmax.f32 %v451, 0.0
        %v529 = vmax.f32 %v455, 0.0
        %v530 = vmax.f32 %v457, 0.0
        %v531 = vmax.f32 %v461, 0.0
        %v532 = vmax.f32 %v463, 0.0
        %v533 = vmax.f32 %v467, 0.0
        %v534 = vmax.f32 %v469, 0.0
        %v535 = vmax.f32 %v473, 0.0
        %v536 = vmax.f32 %v475, 0.0
        %v537 = vmax.f32 %v479, 0.0
        %v538 = vmax.f32 %v481, 0.0
        %v539 = vmax.f32 %v485, 0.0
        %v540 = vmax.f32 %v487, 0.0
        %v541 = vmax.f32 %v491, 0.0
        %v542 = vmax.f32 %v493, 0.0
        %v543 = vmax.f32 %v497, 0.0
        %v544 = vmax.f32 %v499, 0.0
        %v545 = vmax.f32 %v503, 0.0
        %v546 = vmax.f32 %v505, 0.0
        %v547 = vmax.f32 %v509, 0.0
        %v548 = vmax.f32 %v511, 0.0
        %v549 = vmax.f32 %v515, 0.0
        %v550 = vmax.f32 %v517, 0.0
        %v551 = vadd.f32 %v519, %v250
        %v552 = vadd.f32 %v520, %v251
        %v553 = vadd.f32 %v521, %v252
        %v554 = vadd.f32 %v522, %v253
        %v555 = vadd.f32 %v523, %v254
        %v556 = vadd.f32 %v524, %v255
        %v557 = vadd.f32 %v525, %v256
        %v558 = vadd.f32 %v526, %v257
        %v559 = vadd.f32 %v527, %v258
        %v560 = vadd.f32 %v528, %v259
        %v561 = vadd.f32 %v529, %v260
        %v562 = vadd.f32 %v530, %v261
        %v563 = vadd.f32 %v531, %v262
        %v564 = vadd.f32 %v532, %v263
        %v565 = vadd.f32 %v533, %v264
        %v566 = vadd.f32 %v534, %v265
        %v567 = vadd.f32 %v535, %v266
        %v568 = vadd.f32 %v536, %v267
        %v569 = vadd.f32 %v537, %v268
        %v570 = vadd.f32 %v538, %v269
        %v571 = vadd.f32 %v539, %v270
        %v572 = vadd.f32 %v540, %v271
        %v573 = vadd.f32 %v541, %v272
        %v574 = vadd.f32 %v542, %v273
        %v575 = vadd.f32 %v543, %v274
        %v576 = vadd.f32 %v544, %v275
        %v577 = vadd.f32 %v545, %v276
        %v578 = vadd.f32 %v546, %v277
        %v579 = vadd.f32 %v547, %v278
        %v580 = vadd.f32 %v548, %v279
        %v581 = vadd.f32 %v549, %v280
        %v582 = vadd.f32 %v550, %v281
        %583 = vst [vmem:[%s240] sm:$0xff] %v551
        %584 = vst [vmem:[%s240 + $0x8] sm:$0xff] %v552
        %585 = vst [vmem:[%s240 + $0x10] sm:$0xff] %v553
        %586 = vst [vmem:[%s240 + $0x18] sm:$0xff] %v554
        %587 = vst [vmem:[%s240 + $0x20] sm:$0xff] %v555
        %588 = vst [vmem:[%s240 + $0x28] sm:$0xff] %v556
        %589 = vst [vmem:[%s240 + $0x30] sm:$0xff] %v557
        %590 = vst [vmem:[%s240 + $0x38] sm:$0xff] %v558
        %591 = vst [vmem:[%s240 + $0x40] sm:$0xff] %v559
        %592 = vst [vmem:[%s240 + $0x48] sm:$0xff] %v560
        %593 = vst [vmem:[%s240 + $0x50] sm:$0xff] %v561
        %594 = vst [vmem:[%s240 + $0x58] sm:$0xff] %v562
        %595 = vst [vmem:[%s240 + $0x60] sm:$0xff] %v563
        %596 = vst [vmem:[%s240 + $0x68] sm:$0xff] %v564
        %597 = vst [vmem:[%s240 + $0x70] sm:$0xff] %v565
        %598 = vst [vmem:[%s240 + $0x78] sm:$0xff] %v566
        %599 = vst [vmem:[%s240 + $0x80] sm:$0xff] %v567
        %600 = vst [vmem:[%s240 + $0x88] sm:$0xff] %v568
        %601 = vst [vmem:[%s240 + $0x90] sm:$0xff] %v569
        %602 = vst [vmem:[%s240 + $0x98] sm:$0xff] %v570
        %603 = vst [vmem:[%s240 + $0xa0] sm:$0xff] %v571
        %604 = vst [vmem:[%s240 + $0xa8] sm:$0xff] %v572
        %605 = vst [vmem:[%s240 + $0xb0] sm:$0xff] %v573
        %606 = vst [vmem:[%s240 + $0xb8] sm:$0xff] %v574
        %607 = vst [vmem:[%s240 + $0xc0] sm:$0xff] %v575
        %608 = vst [vmem:[%s240 + $0xc8] sm:$0xff] %v576
        %609 = vst [vmem:[%s240 + $0xd0] sm:$0xff] %v577
        %610 = vst [vmem:[%s240 + $0xd8] sm:$0xff] %v578
        %611 = vst [vmem:[%s240 + $0xe0] sm:$0xff] %v579
        %612 = vst [vmem:[%s240 + $0xe8] sm:$0xff] %v580
        %613 = vst [vmem:[%s240 + $0xf0] sm:$0xff] %v581
        %614 = vst [vmem:[%s240 + $0xf8] sm:$0xff] %v582
        %s615 = sand.u32 %s121, 1
        %s616 = scalar_lea.sflag [#allocation4], %s615
        %s617 = sand.u32 %s121, 1
        %s618 = smul.addr %s617, 256
        %s619 = scalar_lea.vmem [#allocation7], %s618
        // Predicated region
        $region41: #{tpu_custom_call.1} parent=31 // pred_check
          %p620 = pneg %p131
        $region42: #{tpu_custom_call.1} parent=31 // pred_check_branch
          %622 = sbr.rel (%p620) target = $region44
        $region43: #{tpu_custom_call.1} parent=31 // pred_region
          %s623 = smul.u32 16, %s25
          %s624 = smul.u32 2, %s26
          %s626 = ssub.s32 4096, 4096
          %627 = vsyncadd %s616, %s626
          %s628 = smul.addr %s623, 2
          %s629 = sadd.s32 %s624, %s628
          %s630 = smul.addr %s629, 128
          %s631 = scalar_lea.hbm %s3, %s630
          %s632 = sshll.u32 %s619, 4
          %s633 = int_to_ptr.vmem [resolvable:$true] %s632
          %638 = dma.vmem_to_hbm [thread:$0]  %s633, 4096, %s631, %s616, 256, 256, 16
        $region44: #{tpu_custom_call.1} parent=31 // pred_fallthru
          _
      $region32: #{tpu_custom_call.1} parent=5 // pred_fallthru
        _
      %p639 = scmp.le.s32.totalorder 2, %s16
      // Predicated region
      $region45: #{tpu_custom_call.1} parent=5 // pred_check
        %p640 = pneg %p639
      $region46: #{tpu_custom_call.1} parent=5 // pred_check_branch
        %642 = sbr.rel (%p640) target = $region48
      $region47: #{tpu_custom_call.1} parent=5 // pred_region
        %s643 = ssub.s32 %s16, 2
        // Predicated region
        $region49: #{tpu_custom_call.1} parent=47 // pred_check
          %p644 = pneg %p137
        $region50: #{tpu_custom_call.1} parent=47 // pred_check_branch
          %646 = sbr.rel (%p644) target = $region52
        $region51: #{tpu_custom_call.1} parent=47 // pred_region
          %s647 = sand.u32 %s122, 1
          %s648 = scalar_lea.sflag [#allocation4], %s647
          %s649 = sand.u32 %s122, 1
          %s650 = smul.addr %s649, 256
          %s651 = scalar_lea.vmem [#allocation7], %s650
          %652 = dma.done %s648, 4096
        $region52: #{tpu_custom_call.1} parent=47 // pred_fallthru
          _
      $region48: #{tpu_custom_call.1} parent=5 // pred_fallthru
        _
    $region6: #{tpu_custom_call.1} parent=1 // loop_footer
      %s20 = sadd.s32 1, %s16
    $region7: #{tpu_custom_call.1} parent=1 // loop_footer_branch
      %15 = sbr.rel target = $region3
    $region8: #{tpu_custom_call.1} parent=1 // loop_exit
      _
    %653 = vsyncpa [#allocation3], 1
    %s654 = scalar_lea.sflag [#allocation3], 1
    %655 = vsyncpa %s654, 1
    %656 = vsyncpa [#allocation6], 1
    %657 = vsyncpa [#allocation4], 1
    %s658 = scalar_lea.sflag [#allocation4], 1
    %659 = vsyncpa %s658, 1

</llo_original>
